<compile_context>
chip_gen: v6e
topology: v6e:2x2x1
jax: 0.10.0
libtpu: 0.0.40
codegen_flags: <defaults>
</compile_context>

<pallas_src>
import jax
import jax.numpy as jnp
from jax.experimental import pallas as pl
from jax.experimental.pallas import tpu as pltpu


def _round_up(x, m):
    return ((x + m - 1) // m) * m


def _vmem_limit_bytes():
    """Per-generation VMEM limit: headroom on v7x, raised default on v5e/v6e."""
    try:
        phys = pltpu.get_tpu_info().vmem_capacity_bytes
    except Exception:
        phys = 128 * 1024 * 1024
    if phys <= 64 * 1024 * 1024:          # v7x: 64 MiB physical per TensorCore
        return 48 * 1024 * 1024
    return 100 * 1024 * 1024              # v5e/v6e: physical is 128 MiB


def _select_config(tb, H_pad, x_bytes, w_bytes, out_bytes, vmem_limit,
                   allow_single_shot=True):
    """Returns (tn, tk, single_shot)."""
    budget = int(vmem_limit * 0.75)       # leave room for compiler scratch
    tn_cands = [t for t in (1024, 512, 256, 128) if t <= H_pad and H_pad % t == 0]
    # Keep >= 2 n-blocks when H allows it so the v7x megacore can shard the
    # weight stream across its two TensorCores.
    pref = [t for t in tn_cands if H_pad // t >= 2] or tn_cands

    if allow_single_shot:
        # 1) Single-shot: whole reduction in one dot (no k axis, no scratch).
        for tn in pref:
            need = 2 * (tb * H_pad * x_bytes + H_pad * tn * w_bytes
                        + tb * tn * out_bytes + tn * 4)
            if need <= budget:
                return tn, H_pad, True

    # 2) Fallback: tiled reduction with an f32 accumulator scratch.
    for tn in pref:
        for tk in (2048, 1024, 512, 256, 128):
            if tk > H_pad or H_pad % tk:
                continue
            need = (2 * (tb * tk * x_bytes + tk * tn * w_bytes
                         + tb * tn * out_bytes + tn * 4) + tb * tn * 4)
            if need <= budget:
                return tn, tk, False
    return 128, 128, False


def _pooler_kernel_fused(x_ref, w_ref, b_ref, o_ref):
    # x_ref: [tb, H_pad], w_ref: [H_pad, tn] (already [in,out]), b_ref: [1, tn]
    acc = jnp.dot(x_ref[...], w_ref[...], preferred_element_type=jnp.float32)
    acc = acc + b_ref[...].astype(jnp.float32)
    o_ref[...] = jnp.tanh(acc).astype(o_ref.dtype)


def _pooler_kernel_ktiled(x_ref, w_ref, b_ref, o_ref, acc_ref):
    # x_ref: [tb, tk], w_ref: [tk, tn], b_ref: [1, tn], acc_ref: [tb, tn] f32
    k = pl.program_id(2)

    @pl.when(k == 0)
    def _init():
        acc_ref[...] = jnp.broadcast_to(
            b_ref[...].astype(jnp.float32), acc_ref.shape)

    acc_ref[...] += jnp.dot(
        x_ref[...], w_ref[...], preferred_element_type=jnp.float32)

    @pl.when(k == pl.num_programs(2) - 1)
    def _finalize():
        o_ref[...] = jnp.tanh(acc_ref[...]).astype(o_ref.dtype)


def prepare_pooler_params(weight, bias):
    """ONE-TIME (load-time) prep of nn.Linear(H, H) parameters.

    weight: [H_out, H_in] (PyTorch layout), bias: [H_out].
    Transposes to [H_in, H_out] and zero-pads to a lane-dense multiple of 128
    so the per-call path never touches the H x H weight outside the kernel.
    """
    H_out, H_in = weight.shape
    assert H_out == H_in, "Pooler uses a square Linear(H, H)"
    H = H_out
    H_pad = _round_up(H, 128)
    w_p = jnp.pad(weight.T, ((0, H_pad - H), (0, H_pad - H)))
    b_p = jnp.pad(bias, (0, H_pad - H)).reshape(1, H_pad)
    return w_p, b_p, H


def pooler_forward(hidden_states, params, *, force_ktiled=False):
    """hidden_states: [L, B, S, H]; params from prepare_pooler_params."""
    w_p, b_p, H = params
    H_pad = w_p.shape[0]
    out_dtype = hidden_states.dtype

    # Cheap JAX glue: last layer, first token -> [B, H].
    first_token = hidden_states[-1, :, 0, :]
    B = first_token.shape[0]
    assert first_token.shape[1] == H

    sub = 16 if first_token.dtype == jnp.bfloat16 else 8
    B_pad = _round_up(B, sub)
    tb = B_pad if B_pad <= 512 else 512
    B_pad = _round_up(B_pad, tb)          # ensure divisibility (no-op usually)

    if B_pad != B or H_pad != H:
        x_p = jnp.pad(first_token, ((0, B_pad - B), (0, H_pad - H)))
    else:
        x_p = first_token

    vmem_limit = _vmem_limit_bytes()
    tn, tk, single_shot = _select_config(
        tb, H_pad,
        x_p.dtype.itemsize, w_p.dtype.itemsize, jnp.dtype(out_dtype).itemsize,
        vmem_limit, allow_single_shot=not force_ktiled)

    if single_shot:
        out = pl.pallas_call(
            _pooler_kernel_fused,
            out_shape=jax.ShapeDtypeStruct((B_pad, H_pad), out_dtype),
            grid=(B_pad // tb, H_pad // tn),
            in_specs=[
                pl.BlockSpec((tb, H_pad), lambda b, n: (b, 0)),   # activations
                pl.BlockSpec((H_pad, tn), lambda b, n: (0, n)),   # weight slab
                pl.BlockSpec((1, tn), lambda b, n: (0, n)),       # bias slab
            ],
            out_specs=pl.BlockSpec((tb, tn), lambda b, n: (b, n)),
            compiler_params=pltpu.CompilerParams(
                dimension_semantics=("parallel", "parallel"),
                vmem_limit_bytes=vmem_limit,
            ),
        )(x_p, w_p, b_p)
    else:
        out = pl.pallas_call(
            _pooler_kernel_ktiled,
            out_shape=jax.ShapeDtypeStruct((B_pad, H_pad), out_dtype),
            grid=(B_pad // tb, H_pad // tn, H_pad // tk),
            in_specs=[
                pl.BlockSpec((tb, tk), lambda b, n, k: (b, k)),
                pl.BlockSpec((tk, tn), lambda b, n, k: (k, n)),
                pl.BlockSpec((1, tn), lambda b, n, k: (0, n)),
            ],
            out_specs=pl.BlockSpec((tb, tn), lambda b, n, k: (b, n)),
            scratch_shapes=[pltpu.VMEM((tb, tn), jnp.float32)],
            compiler_params=pltpu.CompilerParams(
                dimension_semantics=("parallel", "parallel", "arbitrary"),
                vmem_limit_bytes=vmem_limit,
            ),
        )(x_p, w_p, b_p)

    return out[:B, :H]


if __name__ == "__main__":
    key = jax.random.PRNGKey(0)

    def _check(L, B, S, H, dtype=jnp.float32, force_ktiled=False):
        k_hs, k_w, k_b = jax.random.split(jax.random.fold_in(key, H), 3)
        hidden_states = jax.random.normal(k_hs, (L, B, S, H), dtype=dtype)
        # Synthetic nn.Linear(H, H) parameters (PyTorch layout: [out, in]).
        weight = (jax.random.normal(k_w, (H, H), dtype=dtype) * 0.05).astype(dtype)
        bias = (jax.random.normal(k_b, (H,), dtype=dtype) * 0.05).astype(dtype)

        params = prepare_pooler_params(weight, bias)   # one-time prep
        out = jax.block_until_ready(
            pooler_forward(hidden_states, params, force_ktiled=force_ktiled))

        ref = jnp.tanh(hidden_states[-1][:, 0, :] @ weight.T + bias)
        assert out.shape == (B, H)
        assert jnp.allclose(out, ref, atol=1e-5, rtol=1e-5)

    _check(3, 2, 8, 32)                        # tiny, padded path (single-shot)
    _check(2, 16, 8, 256)                      # 128-aligned, multi n-block
    _check(2, 16, 8, 256, force_ktiled=True)   # exercise k-tiled fallback
    print("KERNEL_OK")
</pallas_src>

<mosaic_0001>
module attributes {stable_mosaic.version = 11 : i64} {
  func.func @_pooler_kernel_fused(%arg0: i32, %arg1: i32, %arg2: memref<8x128xf32, #tpu.memory_space<vmem>>, %arg3: memref<128x128xf32, #tpu.memory_space<vmem>>, %arg4: memref<1x128xf32, #tpu.memory_space<vmem>>, %arg5: memref<8x128xf32, #tpu.memory_space<vmem>>) attributes {dimension_semantics = [#tpu.dimension_semantics<parallel>, #tpu.dimension_semantics<parallel>], iteration_bounds = array<i64: 1, 1>, scalar_prefetch = 0 : i64, scratch_operands = 0 : i64, tpu.core_type = #tpu.core_type<tc>, window_params = [{transform_indices = @transform_0, window_bounds = array<i64: 8, 128>}, {transform_indices = @transform_1, window_bounds = array<i64: 128, 128>}, {transform_indices = @transform_2, window_bounds = array<i64: 1, 128>}, {transform_indices = @transform_3, window_bounds = array<i64: 8, 128>}]} {
    %c0 = arith.constant 0 : index
    %c0_0 = arith.constant 0 : index
    %0 = vector.load %arg2[%c0, %c0_0] : memref<8x128xf32, #tpu.memory_space<vmem>>, vector<8x128xf32>
    %c0_1 = arith.constant 0 : index
    %c0_2 = arith.constant 0 : index
    %1 = vector.load %arg3[%c0_1, %c0_2] : memref<128x128xf32, #tpu.memory_space<vmem>>, vector<128x128xf32>
    %cst = arith.constant dense<0.000000e+00> : vector<8x128xf32>
    %2 = tpu.matmul %0, %1, %cst {dimension_numbers = #tpu.dot_dimension_numbers<[1], [0], [0], [1], [0, 0, 1, 1], [], []>} : vector<8x128xf32>, vector<128x128xf32>, vector<8x128xf32> -> vector<8x128xf32>
    %c0_3 = arith.constant 0 : index
    %c0_4 = arith.constant 0 : index
    %3 = vector.load %arg4[%c0_3, %c0_4] : memref<1x128xf32, #tpu.memory_space<vmem>>, vector<1x128xf32>
    %4 = vector.broadcast %3 : vector<1x128xf32> to vector<8x128xf32>
    %5 = arith.addf %2, %4 : vector<8x128xf32>
    %6 = math.tanh %5 : vector<8x128xf32>
    %c0_5 = arith.constant 0 : index
    %c0_6 = arith.constant 0 : index
    %7 = vector.load %arg5[%c0_5, %c0_6] : memref<8x128xf32, #tpu.memory_space<vmem>>, vector<8x128xf32>
    tpu.vector_store %arg5[%c0_5, %c0_6], %6 {strides = array<i32>} : memref<8x128xf32, #tpu.memory_space<vmem>>, vector<8x128xf32>,
    return
  }
  func.func @transform_0(%arg0: i32, %arg1: i32) -> (i32, i32) {
    %c0_i32 = arith.constant 0 : i32
    %c0_i32_0 = arith.constant 0 : i32
    return %arg0, %c0_i32 : i32, i32
  }
  func.func @transform_1(%arg0: i32, %arg1: i32) -> (i32, i32) {
    %c0_i32 = arith.constant 0 : i32
    %c0_i32_0 = arith.constant 0 : i32
    return %c0_i32, %arg1 : i32, i32
  }
  func.func @transform_2(%arg0: i32, %arg1: i32) -> (i32, i32) {
    %c0_i32 = arith.constant 0 : i32
    %c0_i32_0 = arith.constant 0 : i32
    return %c0_i32, %arg1 : i32, i32
  }
  func.func @transform_3(%arg0: i32, %arg1: i32) -> (i32, i32) {
    %c0_i32 = arith.constant 0 : i32
    return %arg0, %arg1 : i32, i32
  }
}

</mosaic_0001>

<llo_original>
// kernel: tpu_custom_call.1
$region0: #{tpu_custom_call.1}
  #allocation0 [shape = 'u32[]', space=smem, size = 0x4, offset = 0x4, fixed_abs, tag = 'smem constant byte address 0x4 - core index']
  #allocation1 [shape = 'u32[144,128]{1,0:T(1,128)}', space=vmem, size = 0x12000, scoped, tag = 'internal scratch']
  %s0 = inlined_call_operand.hbm [shape: f32[8,128], index: 0, kind: input, shape index: {}]
  %s1 = inlined_call_operand.hbm [shape: f32[128,128], index: 1, kind: input, shape index: {}]
  %s2 = inlined_call_operand.vmem [shape: f32[1,128], index: 2, kind: input, shape index: {}]
  %s3 = inlined_call_operand.hbm [shape: f32[8,128], index: 3, kind: output, shape index: {}]
  %s4 = sld [smem:[#allocation0]]
  $region30: #{tpu_custom_call.1} parent=0
    _
  %s6 = ssub.s32 1, %s4
  %s7 = scalar_select 0, %s6, %s4
  $region1: #{tpu_custom_call.1} parent=0
    #allocation2 [shape = 'u8[4096]{0}', space=vmem, size = 0x1000, scoped, tag = 'input window, operand 0, single buffered']
    #allocation3 [shape = 's32[1]{0}', space=sflag, size = 0x4, scoped, tag = 'scoped memory for tpu_custom_call.1']
    #allocation4 [shape = 's32[1]{0}', space=sflag, size = 0x4, scoped, tag = 'scoped memory for tpu_custom_call.1']
    #allocation5 [shape = 'u8[65536]{0}', space=vmem, size = 0x10000, scoped, tag = 'input window, operand 1, single buffered']
    #allocation6 [shape = 's32[1]{0}', space=sflag, size = 0x4, scoped, tag = 'scoped memory for tpu_custom_call.1']
    #allocation7 [shape = 'u8[4096]{0}', space=vmem, size = 0x1000, scoped, tag = 'output window, operand 0, single buffered']
    %8 = vsyncpa [#allocation3], 0
    %9 = vsyncpa [#allocation6], 0
    %10 = vsyncpa [#allocation4], 0
    // Predicated region
    $region2: #{tpu_custom_call.1} parent=1 // pred_check
      _
    $region3: #{tpu_custom_call.1} parent=1 // pred_check_branch
      %12 = sbr.rel (0) target = $region5
    $region4: #{tpu_custom_call.1} parent=1 // pred_region
      %s14 = ssub.s32 128, 128
      %15 = vsyncadd [#allocation3], %s14
      %s17 = sshll.u32 [#allocation2], 4
      %s18 = int_to_ptr.vmem [resolvable:$true] %s17
      %20 = dma.hbm_to_vmem [thread:$0]  %s0, 128, %s18, [#allocation3]
    $region5: #{tpu_custom_call.1} parent=1 // pred_fallthru
      _
    // Predicated region
    $region6: #{tpu_custom_call.1} parent=1 // pred_check
      _
    $region7: #{tpu_custom_call.1} parent=1 // pred_check_branch
      %22 = sbr.rel (0) target = $region9
    $region8: #{tpu_custom_call.1} parent=1 // pred_region
      %s24 = ssub.s32 2048, 2048
      %25 = vsyncadd [#allocation6], %s24
      %s26 = sshll.u32 [#allocation5], 4
      %s27 = int_to_ptr.vmem [resolvable:$true] %s26
      %32 = dma.hbm_to_vmem [thread:$0]  %s1, 2048, %s27, [#allocation6], 128, 128, 8
    $region9: #{tpu_custom_call.1} parent=1 // pred_fallthru
      _
    // Predicated region
    $region10: #{tpu_custom_call.1} parent=1 // pred_check
      _
    $region11: #{tpu_custom_call.1} parent=1 // pred_check_branch
      %34 = sbr.rel (0) target = $region13
    $region12: #{tpu_custom_call.1} parent=1 // pred_region
      _
    $region13: #{tpu_custom_call.1} parent=1 // pred_fallthru
      _
    // Predicated region
    $region14: #{tpu_custom_call.1} parent=1 // pred_check
      _
    $region15: #{tpu_custom_call.1} parent=1 // pred_check_branch
      %36 = sbr.rel (0) target = $region17
    $region16: #{tpu_custom_call.1} parent=1 // pred_region
      %37 = dma.done [#allocation3], 128
    $region17: #{tpu_custom_call.1} parent=1 // pred_fallthru
      _
    // Predicated region
    $region18: #{tpu_custom_call.1} parent=1 // pred_check
      _
    $region19: #{tpu_custom_call.1} parent=1 // pred_check_branch
      %39 = sbr.rel (0) target = $region21
    $region20: #{tpu_custom_call.1} parent=1 // pred_region
      %40 = dma.done [#allocation6], 2048
    $region21: #{tpu_custom_call.1} parent=1 // pred_fallthru
      _
    %v41 = vld [vmem:[#allocation2] sm:$0xff]
    %v42 = vld [vmem:[#allocation5] sm:$0xff]
    %v43 = vld [vmem:[#allocation5 + $0x8] sm:$0xff]
    %v44 = vld [vmem:[#allocation5 + $0x10] sm:$0xff]
    %v45 = vld [vmem:[#allocation5 + $0x18] sm:$0xff]
    %v46 = vld [vmem:[#allocation5 + $0x20] sm:$0xff]
    %v47 = vld [vmem:[#allocation5 + $0x28] sm:$0xff]
    %v48 = vld [vmem:[#allocation5 + $0x30] sm:$0xff]
    %v49 = vld [vmem:[#allocation5 + $0x38] sm:$0xff]
    %v50 = vld [vmem:[#allocation5 + $0x40] sm:$0xff]
    %v51 = vld [vmem:[#allocation5 + $0x48] sm:$0xff]
    %v52 = vld [vmem:[#allocation5 + $0x50] sm:$0xff]
    %v53 = vld [vmem:[#allocation5 + $0x58] sm:$0xff]
    %v54 = vld [vmem:[#allocation5 + $0x60] sm:$0xff]
    %v55 = vld [vmem:[#allocation5 + $0x68] sm:$0xff]
    %v56 = vld [vmem:[#allocation5 + $0x70] sm:$0xff]
    %v57 = vld [vmem:[#allocation5 + $0x78] sm:$0xff]
    %v58 = vld [vmem:[%s2] sm:$0x1]
    %v60 = vlaneseq
    %v61 = vshrl.u32 %v60, 7
    %v62 = vsub.s32 0, %v61
    %v63 = vrot.slane %v58, %v62
    %65 = vmatprep.subr.mxu0 0.0
    %66 = vmatpush1.msra.mxu0 %v57
    %67 = vmatprep.subr.mxu0 0.0
    %68 = vmatpush1.msra.mxu0 %v56
    %69 = vmatprep.subr.mxu0 0.0
    %70 = vmatpush1.msra.mxu0 %v55
    %71 = vmatprep.subr.mxu0 0.0
    %72 = vmatpush1.msra.mxu0 %v54
    %73 = vmatprep.subr.mxu0 0.0
    %74 = vmatpush1.msra.mxu0 %v53
    %75 = vmatprep.subr.mxu0 0.0
    %76 = vmatpush1.msra.mxu0 %v52
    %77 = vmatprep.subr.mxu0 0.0
    %78 = vmatpush1.msra.mxu0 %v51
    %79 = vmatprep.subr.mxu0 0.0
    %80 = vmatpush1.msra.mxu0 %v50
    %81 = vmatprep.subr.mxu0 0.0
    %82 = vmatpush1.msra.mxu0 %v49
    %83 = vmatprep.subr.mxu0 0.0
    %84 = vmatpush1.msra.mxu0 %v48
    %85 = vmatprep.subr.mxu0 0.0
    %86 = vmatpush1.msra.mxu0 %v47
    %87 = vmatprep.subr.mxu0 0.0
    %88 = vmatpush1.msra.mxu0 %v46
    %89 = vmatprep.subr.mxu0 0.0
    %90 = vmatpush1.msra.mxu0 %v45
    %91 = vmatprep.subr.mxu0 0.0
    %92 = vmatpush1.msra.mxu0 %v44
    %93 = vmatprep.subr.mxu0 0.0
    %94 = vmatpush1.msra.mxu0 %v43
    %95 = vmatprep.subr.mxu0 0.0
    %96 = vmatpush1.msra.mxu0 %v42
    %97 = vmatprep.subr.mxu0 0.0
    %98 = vmatpush2.msra.mxu0 0.0
    %99 = vmatprep.subr.mxu0 0.0
    %100 = vmatpush2.msra.mxu0 0.0
    %101 = vmatprep.subr.mxu0 0.0
    %102 = vmatpush2.msra.mxu0 0.0
    %103 = vmatprep.subr.mxu0 0.0
    %104 = vmatpush2.msra.mxu0 0.0
    %105 = vmatprep.subr.mxu0 0.0
    %106 = vmatpush2.msra.mxu0 0.0
    %107 = vmatprep.subr.mxu0 0.0
    %108 = vmatpush2.msra.mxu0 0.0
    %109 = vmatprep.subr.mxu0 0.0
    %110 = vmatpush2.msra.mxu0 0.0
    %111 = vmatprep.subr.mxu0 0.0
    %112 = vmatpush2.msra.mxu0 0.0
    %113 = vmatprep.subr.mxu0 0.0
    %114 = vmatpush2.msra.mxu0 0.0
    %115 = vmatprep.subr.mxu0 0.0
    %116 = vmatpush2.msra.mxu0 0.0
    %117 = vmatprep.subr.mxu0 0.0
    %118 = vmatpush2.msra.mxu0 0.0
    %119 = vmatprep.subr.mxu0 0.0
    %120 = vmatpush2.msra.mxu0 0.0
    %121 = vmatprep.subr.mxu0 0.0
    %122 = vmatpush2.msra.mxu0 0.0
    %123 = vmatprep.subr.mxu0 0.0
    %124 = vmatpush2.msra.mxu0 0.0
    %125 = vmatprep.subr.mxu0 0.0
    %126 = vmatpush2.msra.mxu0 0.0
    %127 = vmatprep.subr.mxu0 0.0
    %128 = vmatpush2.msra.mxu0 0.0
    %129 = vmatprep.mubr.f32.mxu0 0.0
    %130 = vmatmul.mubr.f32.gmra.mxu0 %v41
    %v131 = vpop.f32.mrf.mxu0
    %v132 = vadd.f32 %v63, %v131
    %v133 = vpop.f32.mrf.mxu0
    %134 = vdwg.mxu0
    %v135 = vtanh.pop %v132
    %136 = vst [vmem:[#allocation7] sm:$0xff] %v135
    // Predicated region
    $region22: #{tpu_custom_call.1} parent=1 // pred_check
      _
    $region23: #{tpu_custom_call.1} parent=1 // pred_check_branch
      %138 = sbr.rel (0) target = $region25
    $region24: #{tpu_custom_call.1} parent=1 // pred_region
      %s140 = ssub.s32 128, 128
      %141 = vsyncadd [#allocation4], %s140
      %s143 = sshll.u32 [#allocation7], 4
      %s144 = int_to_ptr.vmem [resolvable:$true] %s143
      %146 = dma.vmem_to_hbm [thread:$0]  %s144, 128, %s3, [#allocation4]
    $region25: #{tpu_custom_call.1} parent=1 // pred_fallthru
      _
    // Predicated region
    $region26: #{tpu_custom_call.1} parent=1 // pred_check
      _
    $region27: #{tpu_custom_call.1} parent=1 // pred_check_branch
      %148 = sbr.rel (0) target = $region29
    $region28: #{tpu_custom_call.1} parent=1 // pred_region
      %149 = dma.done [#allocation4], 128
    $region29: #{tpu_custom_call.1} parent=1 // pred_fallthru
      _
    %150 = vsyncpa [#allocation3], 1
    %151 = vsyncpa [#allocation6], 1
    %152 = vsyncpa [#allocation4], 1

</llo_original>
